<compile_context>
chip_gen: v6e
topology: v6e:2x2x1
jax: 0.10.0
libtpu: 0.0.40
codegen_flags: <defaults>
</compile_context>

<pallas_src>
import functools

import jax
import jax.numpy as jnp
from jax.experimental import pallas as pl
from jax.experimental.pallas import tpu as pltpu


_TWO_PASS_VMEM_LIMIT = 32 << 20   # scoped VMEM for the tiled two-pass path
_FUSED_VMEM_LIMIT = 40 << 20      # scoped VMEM for the single fused kernel
_FUSED_GATE_BYTES = 24 << 20      # conservative footprint gate for the fused path


def r_d_max_func(itr):
    """Default max r and d provider as recommended in the paper."""
    if itr < 5000:
        return (1.0, 0.0)
    if itr < 40000:
        r_max = 2.0 / 35000.0 * (itr - 5000) + 1.0
    else:
        r_max = 3.0
    if itr < 25000:
        d_max = 5.0 / 20000.0 * (itr - 5000)
    else:
        d_max = 5.0
    return (float(r_max), float(d_max))


# ---------------------------------------------------------------------------
# Tile selection
# ---------------------------------------------------------------------------
def _choose_tiles(c, s, itemsize, tile_override):
    """(tc, ts): channel (sublane) / spatial (lane) tile sizes."""
    if tile_override is not None:
        tc, ts = tile_override
        return min(tc, c), min(ts, s)
    # Spatial tile: lane-dense (multiple of 128), 512-2048 wide regardless of N*C;
    # full S when S is already small.
    ts = s if s <= 2048 else 1024
    # Channel tile: bound the x block to ~4 MiB (real dtype itemsize), multiple of 8.
    tc = (4 << 20) // max(1, ts * itemsize)
    tc = max(8, (tc // 8) * 8)
    if tc >= c:
        tc = c
    return tc, ts


def _fused_fits(n, c, s, itemsize):
    # Rough fused VMEM footprint: in + out buffers plus a few f32 temporaries
    # for the cast / centered-variance pass.
    est = n * c * s * (4 * itemsize + 12)
    return est <= _FUSED_GATE_BYTES


# ---------------------------------------------------------------------------
# Pallas kernels
# ---------------------------------------------------------------------------
def _stats_kernel(x_ref, h_ref, sum_ref, sumsq_ref, *, ts, s_total, needs_mask):
    """Accumulate shifted per-channel sum / sum-of-squares over spatial tiles.

    x_ref:    (1, TC, TS) tile of the (N, C, S) input.
    h_ref:    (TC, 1) per-channel shift (running_mean) -- reduces cancellation in
              the single-pass variance E[(x-h)^2] - E[x-h]^2 (f32 accumulation).
    sum_ref / sumsq_ref: (1, TC, 1) f32 accumulators, resident across the
              spatial ("arbitrary") grid axis.
    """
    si = pl.program_id(2)

    @pl.when(si == 0)
    def _init():
        sum_ref[...] = jnp.zeros_like(sum_ref)
        sumsq_ref[...] = jnp.zeros_like(sumsq_ref)

    def _accum(mask_tail):
        xs = x_ref[...].astype(jnp.float32) - h_ref[...][None]   # (1, TC, TS)
        if mask_tail:
            lane = jax.lax.broadcasted_iota(jnp.int32, xs.shape, 2) + si * ts
            xs = jnp.where(lane < s_total, xs, 0.0)
        sum_ref[...] += jnp.sum(xs, axis=2, keepdims=True)
        sumsq_ref[...] += jnp.sum(xs * xs, axis=2, keepdims=True)

    if needs_mask:
        last = pl.num_programs(2) - 1

        @pl.when(si != last)           # unmasked fast path for all but last tile
        def _body():
            _accum(False)

        @pl.when(si == last)           # masked tail only
        def _tail():
            _accum(True)
    else:
        _accum(False)


def _apply_kernel(x_ref, scale_ref, shift_ref, o_ref):
    """out = x * scale + shift with per-channel (sublane) scale/shift."""
    x = x_ref[...].astype(jnp.float32)
    o_ref[...] = (x * scale_ref[...][None] + shift_ref[...][None]).astype(o_ref.dtype)


def _fused_train_kernel(x_ref, rm_ref, rs_ref, rmax_ref, dmax_ref,
                        o_ref, mean_ref, sigma_ref, *, m_total, eps):
    """Single-read fused BatchRenorm training forward (whole slab VMEM-resident)."""
    inv_m = 1.0 / float(m_total)
    xf = x_ref[...].astype(jnp.float32)                              # (N, C, S)
    ch_sum = jnp.sum(jnp.sum(xf, axis=2, keepdims=True), axis=0)     # (C, 1)
    mean_x = ch_sum * inv_m
    centered = xf - mean_x[None]                                     # true centering
    ch_sq = jnp.sum(jnp.sum(centered * centered, axis=2, keepdims=True), axis=0)
    var_x = ch_sq * inv_m

    mean_b = mean_x + eps          # reference adds eps to x before taking the mean
    sigma_b = jnp.sqrt(var_x + eps)

    rm = rm_ref[...]               # (C, 1)
    rs = rs_ref[...]               # (C, 1)
    r_max = rmax_ref[...]          # (1, 1) device scalar (no recompile on ramp)
    d_max = dmax_ref[...]          # (1, 1)
    r = jnp.clip(sigma_b / rs, 1.0 / r_max, r_max)
    d = jnp.clip((mean_b - rm) / rs, -d_max, d_max)

    scale = r / sigma_b
    shift = d - mean_b * scale
    o_ref[...] = (xf * scale[None] + shift[None]).astype(o_ref.dtype)
    mean_ref[...] = mean_b
    sigma_ref[...] = sigma_b


# ---------------------------------------------------------------------------
# pallas_call wrappers
# ---------------------------------------------------------------------------
def _stats_pass(x3, rm, n, c, s, tc, ts):
    needs_mask = (s % ts) != 0
    kernel = functools.partial(_stats_kernel, ts=ts, s_total=s,
                               needs_mask=needs_mask)
    grid = (n, pl.cdiv(c, tc), pl.cdiv(s, ts))
    return pl.pallas_call(
        kernel,
        out_shape=(jax.ShapeDtypeStruct((n, c, 1), jnp.float32),
                   jax.ShapeDtypeStruct((n, c, 1), jnp.float32)),
        grid=grid,
        in_specs=[pl.BlockSpec((1, tc, ts), lambda b, ci, si: (b, ci, si)),
                  pl.BlockSpec((tc, 1), lambda b, ci, si: (ci, 0))],
        out_specs=(pl.BlockSpec((1, tc, 1), lambda b, ci, si: (b, ci, 0)),
                   pl.BlockSpec((1, tc, 1), lambda b, ci, si: (b, ci, 0))),
        compiler_params=pltpu.CompilerParams(
            dimension_semantics=("parallel", "parallel", "arbitrary"),
            vmem_limit_bytes=_TWO_PASS_VMEM_LIMIT),
    )(x3, rm)


def _apply_pass(x3, scale_c, shift_c, n, c, s, tc, ts, out_dtype):
    grid = (n, pl.cdiv(c, tc), pl.cdiv(s, ts))
    return pl.pallas_call(
        _apply_kernel,
        out_shape=jax.ShapeDtypeStruct((n, c, s), out_dtype),
        grid=grid,
        in_specs=[pl.BlockSpec((1, tc, ts), lambda b, ci, si: (b, ci, si)),
                  pl.BlockSpec((tc, 1), lambda b, ci, si: (ci, 0)),
                  pl.BlockSpec((tc, 1), lambda b, ci, si: (ci, 0))],
        out_specs=pl.BlockSpec((1, tc, ts), lambda b, ci, si: (b, ci, si)),
        compiler_params=pltpu.CompilerParams(
            dimension_semantics=("parallel", "parallel", "parallel"),
            vmem_limit_bytes=_TWO_PASS_VMEM_LIMIT),
    )(x3, scale_c, shift_c)


def _fused_train(x3, rm, rs, r_max_2d, d_max_2d, n, c, s, eps):
    kernel = functools.partial(_fused_train_kernel, m_total=n * s, eps=eps)
    vmem = pl.BlockSpec(memory_space=pltpu.MemorySpace.VMEM)
    return pl.pallas_call(
        kernel,
        out_shape=(jax.ShapeDtypeStruct((n, c, s), x3.dtype),
                   jax.ShapeDtypeStruct((c, 1), jnp.float32),
                   jax.ShapeDtypeStruct((c, 1), jnp.float32)),
        in_specs=[vmem, vmem, vmem, vmem, vmem],
        out_specs=(vmem, vmem, vmem),
        compiler_params=pltpu.CompilerParams(
            vmem_limit_bytes=_FUSED_VMEM_LIMIT),
    )(x3, rm, rs, r_max_2d, d_max_2d)


# ---------------------------------------------------------------------------
# Jitted forwards (one dispatch per call: kernels + tiny per-channel math fused)
# ---------------------------------------------------------------------------
def _flatten_spatial(x):
    n, c = x.shape[0], x.shape[1]
    s = 1
    for d in x.shape[2:]:
        s *= d
    return x.reshape(n, c, s), n, c, s


@functools.partial(jax.jit, static_argnames=("eps", "use_fused", "tile_override"))
def _train_forward(x, running_mean, running_sigma, r_max, d_max, *,
                   eps, use_fused, tile_override):
    x3, n, c, s = _flatten_spatial(x)
    itemsize = jnp.dtype(x.dtype).itemsize
    rm = running_mean.reshape(c, 1).astype(jnp.float32)
    rs = running_sigma.reshape(c, 1).astype(jnp.float32)
    r_max = jnp.asarray(r_max, jnp.float32)
    d_max = jnp.asarray(d_max, jnp.float32)

    if use_fused:
        out3, mean_b, sigma_b = _fused_train(
            x3, rm, rs, r_max.reshape(1, 1), d_max.reshape(1, 1), n, c, s, eps)
    else:
        tc, ts = _choose_tiles(c, s, itemsize, tile_override)
        sum_p, sumsq_p = _stats_pass(x3, rm, n, c, s, tc, ts)
        m_total = float(n * s)
        sh_mean = jnp.sum(sum_p, axis=0) / m_total     # (c,1): E[x - rm]
        sh_sq = jnp.sum(sumsq_p, axis=0) / m_total     # (c,1): E[(x - rm)^2]
        mean_x = rm + sh_mean
        var_x = jnp.maximum(sh_sq - sh_mean * sh_mean, 0.0)
        mean_b = mean_x + eps
        sigma_b = jnp.sqrt(var_x + eps)
        r = jnp.clip(sigma_b / rs, 1.0 / r_max, r_max)
        d = jnp.clip((mean_b - rm) / rs, -d_max, d_max)
        # out = bn*r + d = x*(r/sigma_b) + (d - mean_b*r/sigma_b)
        scale_c = r / sigma_b
        shift_c = d - mean_b * scale_c
        out3 = _apply_pass(x3, scale_c, shift_c, n, c, s, tc, ts, x.dtype)

    return out3.reshape(x.shape), mean_b.reshape(-1), sigma_b.reshape(-1)


@functools.partial(jax.jit, static_argnames=("tile_override",))
def _eval_forward(x, running_mean, running_sigma, *, tile_override):
    x3, n, c, s = _flatten_spatial(x)
    itemsize = jnp.dtype(x.dtype).itemsize
    tc, ts = _choose_tiles(c, s, itemsize, tile_override)
    rm = running_mean.reshape(c, 1).astype(jnp.float32)
    rs = running_sigma.reshape(c, 1).astype(jnp.float32)
    scale_c = 1.0 / rs
    shift_c = -rm * scale_c
    out3 = _apply_pass(x3, scale_c, shift_c, n, c, s, tc, ts, x.dtype)
    return out3.reshape(x.shape)


# ---------------------------------------------------------------------------
# Module wrapper
# ---------------------------------------------------------------------------
class BatchRenorm:
    """JAX/Pallas port of the PoseCapsules_experimental2 BatchRenorm (forward only)."""

    def __init__(self, num_features, update_interval, eps=1e-05, momentum=0.1,
                 noise=4.0):
        self.num_features = num_features
        self.update_interval = update_interval - 1
        self.eps = float(eps)
        self.momentum = momentum
        self.noise = noise              # unused in forward (same as reference)
        self.training = True
        # Host-side iteration counter (matches reference .item(); avoids a
        # device->host sync per step).
        self.itr = 0.0
        self.running_mean = jnp.zeros((num_features,), jnp.float32)
        self.running_sigma = jnp.ones((num_features,), jnp.float32)
        # Testing / tuning hooks.
        self.force_two_pass = False
        self._tile_override = None      # optional (tc, ts)

    def __call__(self, x, iteration: int):
        assert x.shape[1] == self.num_features
        n, c = x.shape[0], x.shape[1]
        s = 1
        for d in x.shape[2:]:
            s *= d
        itemsize = jnp.dtype(x.dtype).itemsize

        if self.training:
            r_max, d_max = r_d_max_func(self.itr)
            use_fused = (not self.force_two_pass) and _fused_fits(n, c, s, itemsize)
            out, mean_b, sigma_b = _train_forward(
                x, self.running_mean, self.running_sigma,
                jnp.asarray(r_max, jnp.float32), jnp.asarray(d_max, jnp.float32),
                eps=self.eps, use_fused=use_fused,
                tile_override=self._tile_override)
            # Running-buffer / itr update: host-side side effect, as in the
            # reference (does not touch the returned tensor).
            if iteration == self.update_interval:
                self.itr += 1.0
                self.running_mean = self.running_mean + self.momentum * (
                    mean_b - self.running_mean)
                self.running_sigma = self.running_sigma + self.momentum * (
                    sigma_b - self.running_sigma)
            return out

        return _eval_forward(x, self.running_mean, self.running_sigma,
                             tile_override=self._tile_override)


# ---------------------------------------------------------------------------
# Pure-JAX reference (mirrors the PyTorch forward exactly)
# ---------------------------------------------------------------------------
def ref_forward_train(x, running_mean, running_sigma, itr, eps):
    c = x.shape[1]
    shp = (1, c) + (1,) * (x.ndim - 2)
    x_flat = jnp.moveaxis(x, 1, -1).reshape(-1, c) + eps
    mean_b = x_flat.sum(0) / x_flat.shape[0]
    sigma_b = jnp.sqrt(((x_flat - mean_b) ** 2).sum(0) / x_flat.shape[0] + eps)
    bn = (x - mean_b.reshape(shp)) / sigma_b.reshape(shp)
    r_max, d_max = r_d_max_func(itr)
    r = jnp.clip(sigma_b / running_sigma, 1.0 / r_max, r_max)
    d = jnp.clip((mean_b - running_mean) / running_sigma, -d_max, d_max)
    return bn * r.reshape(shp) + d.reshape(shp)


def ref_forward_eval(x, running_mean, running_sigma):
    c = x.shape[1]
    shp = (1, c) + (1,) * (x.ndim - 2)
    return (x - running_mean.reshape(shp)) / running_sigma.reshape(shp)


# ---------------------------------------------------------------------------
if __name__ == "__main__":
    key = jax.random.PRNGKey(0)
    N, C, H, W = 2, 4, 16, 16
    x = jax.random.normal(key, (N, C, H, W), dtype=jnp.float32) + 1.5

    brn = BatchRenorm(num_features=C, update_interval=3, eps=1e-5, momentum=0.1)

    # --- training, fused single-read path; iteration == update_interval -> buffers update
    brn.training = True
    rm0, rs0, itr0 = brn.running_mean, brn.running_sigma, brn.itr
    y0 = jax.block_until_ready(brn(x, iteration=2))
    y0_ref = ref_forward_train(x, rm0, rs0, itr0, brn.eps)
    assert y0.shape == x.shape and y0.dtype == x.dtype
    assert jnp.allclose(y0, y0_ref, atol=1e-4, rtol=1e-4), "fused train mismatch"

    # --- training, forced tiled two-pass path with a masked last spatial tile
    x2 = jax.random.normal(jax.random.PRNGKey(1), (N, C, 16, 20),
                           dtype=jnp.float32) * 0.5 + 0.25
    brn.itr = 10000.0                     # non-trivial r_max / d_max (clip path)
    brn.force_two_pass = True
    brn._tile_override = (C, 256)         # S=320 -> one full 256 tile + masked 64 tail
    rm1, rs1, itr1 = brn.running_mean, brn.running_sigma, brn.itr
    y1 = jax.block_until_ready(brn(x2, iteration=0))   # no buffer update
    y1_ref = ref_forward_train(x2, rm1, rs1, itr1, brn.eps)
    assert jnp.allclose(y1, y1_ref, atol=1e-4, rtol=1e-4), "two-pass train mismatch"
    brn.force_two_pass = False
    brn._tile_override = None

    # --- eval path (uses the updated running buffers)
    brn.training = False
    y2 = jax.block_until_ready(brn(x, iteration=0))
    y2_ref = ref_forward_eval(x, brn.running_mean, brn.running_sigma)
    assert jnp.allclose(y2, y2_ref, atol=1e-4, rtol=1e-4), "eval mismatch"

    print("KERNEL_OK")
</pallas_src>

<mosaic_0001>
module attributes {stable_mosaic.version = 11 : i64} {
  func.func @_fused_train_kernel(%arg0: memref<2x4x256xf32, #tpu.memory_space<vmem>>, %arg1: memref<4x1xf32, #tpu.memory_space<vmem>>, %arg2: memref<4x1xf32, #tpu.memory_space<vmem>>, %arg3: memref<1x1xf32, #tpu.memory_space<vmem>>, %arg4: memref<1x1xf32, #tpu.memory_space<vmem>>, %arg5: memref<2x4x256xf32, #tpu.memory_space<vmem>>, %arg6: memref<4x1xf32, #tpu.memory_space<vmem>>, %arg7: memref<4x1xf32, #tpu.memory_space<vmem>>) attributes {dimension_semantics = [], scalar_prefetch = 0 : i64, scratch_operands = 0 : i64, tpu.core_type = #tpu.core_type<tc>} {
    %c0 = arith.constant 0 : index
    %c0_0 = arith.constant 0 : index
    %c0_1 = arith.constant 0 : index
    %0 = vector.load %arg0[%c0, %c0_0, %c0_1] : memref<2x4x256xf32, #tpu.memory_space<vmem>>, vector<2x4x256xf32>
    %cst = arith.constant dense<0.000000e+00> : vector<2x4xf32>
    %1 = vector.multi_reduction <add>, %0, %cst [2] : vector<2x4x256xf32> to vector<2x4xf32>
    %2 = vector.shape_cast %1 : vector<2x4xf32> to vector<2x4x1xf32>
    %cst_2 = arith.constant dense<0.000000e+00> : vector<4x1xf32>
    %3 = vector.multi_reduction <add>, %2, %cst_2 [0] : vector<2x4x1xf32> to vector<4x1xf32>
    %cst_3 = arith.constant 0.001953125 : f32
    %4 = vector.broadcast %cst_3 : f32 to vector<4x1xf32>
    %5 = arith.mulf %3, %4 : vector<4x1xf32>
    %6 = vector.shape_cast %5 : vector<4x1xf32> to vector<1x4x1xf32>
    %7 = vector.broadcast %6 : vector<1x4x1xf32> to vector<2x4x256xf32>
    %8 = arith.subf %0, %7 : vector<2x4x256xf32>
    %9 = arith.mulf %8, %8 : vector<2x4x256xf32>
    %cst_4 = arith.constant dense<0.000000e+00> : vector<2x4xf32>
    %10 = vector.multi_reduction <add>, %9, %cst_4 [2] : vector<2x4x256xf32> to vector<2x4xf32>
    %11 = vector.shape_cast %10 : vector<2x4xf32> to vector<2x4x1xf32>
    %cst_5 = arith.constant dense<0.000000e+00> : vector<4x1xf32>
    %12 = vector.multi_reduction <add>, %11, %cst_5 [0] : vector<2x4x1xf32> to vector<4x1xf32>
    %cst_6 = arith.constant 0.001953125 : f32
    %13 = vector.broadcast %cst_6 : f32 to vector<4x1xf32>
    %14 = arith.mulf %12, %13 : vector<4x1xf32>
    %cst_7 = arith.constant 9.99999974E-6 : f32
    %15 = vector.broadcast %cst_7 : f32 to vector<4x1xf32>
    %16 = arith.addf %5, %15 : vector<4x1xf32>
    %cst_8 = arith.constant 9.99999974E-6 : f32
    %17 = vector.broadcast %cst_8 : f32 to vector<4x1xf32>
    %18 = arith.addf %14, %17 : vector<4x1xf32>
    %19 = math.sqrt %18 : vector<4x1xf32>
    %c0_9 = arith.constant 0 : index
    %c0_10 = arith.constant 0 : index
    %20 = vector.load %arg1[%c0_9, %c0_10] : memref<4x1xf32, #tpu.memory_space<vmem>>, vector<4x1xf32>
    %c0_11 = arith.constant 0 : index
    %c0_12 = arith.constant 0 : index
    %21 = vector.load %arg2[%c0_11, %c0_12] : memref<4x1xf32, #tpu.memory_space<vmem>>, vector<4x1xf32>
    %c0_13 = arith.constant 0 : index
    %c0_14 = arith.constant 0 : index
    %22 = vector.load %arg3[%c0_13, %c0_14] : memref<1x1xf32, #tpu.memory_space<vmem>>, vector<1x1xf32>
    %c0_15 = arith.constant 0 : index
    %c0_16 = arith.constant 0 : index
    %23 = vector.load %arg4[%c0_15, %c0_16] : memref<1x1xf32, #tpu.memory_space<vmem>>, vector<1x1xf32>
    %24 = arith.divf %19, %21 : vector<4x1xf32>
    %cst_17 = arith.constant 1.000000e+00 : f32
    %25 = vector.broadcast %cst_17 : f32 to vector<1x1xf32>
    %26 = arith.divf %25, %22 : vector<1x1xf32>
    %27 = vector.broadcast %26 : vector<1x1xf32> to vector<4x1xf32>
    %28 = arith.maximumf %27, %24 : vector<4x1xf32>
    %29 = vector.broadcast %22 : vector<1x1xf32> to vector<4x1xf32>
    %30 = arith.minimumf %29, %28 : vector<4x1xf32>
    %31 = arith.subf %16, %20 : vector<4x1xf32>
    %32 = arith.divf %31, %21 : vector<4x1xf32>
    %cst_18 = arith.constant 0.000000e+00 : f32
    %33 = vector.broadcast %cst_18 : f32 to vector<1x1xf32>
    %34 = arith.subf %33, %23 : vector<1x1xf32>
    %35 = vector.broadcast %34 : vector<1x1xf32> to vector<4x1xf32>
    %36 = arith.maximumf %35, %32 : vector<4x1xf32>
    %37 = vector.broadcast %23 : vector<1x1xf32> to vector<4x1xf32>
    %38 = arith.minimumf %37, %36 : vector<4x1xf32>
    %39 = arith.divf %30, %19 : vector<4x1xf32>
    %40 = arith.mulf %16, %39 : vector<4x1xf32>
    %41 = arith.subf %38, %40 : vector<4x1xf32>
    %42 = vector.shape_cast %39 : vector<4x1xf32> to vector<1x4x1xf32>
    %43 = vector.broadcast %42 : vector<1x4x1xf32> to vector<2x4x256xf32>
    %44 = arith.mulf %0, %43 : vector<2x4x256xf32>
    %45 = vector.shape_cast %41 : vector<4x1xf32> to vector<1x4x1xf32>
    %46 = vector.broadcast %45 : vector<1x4x1xf32> to vector<2x4x256xf32>
    %47 = arith.addf %44, %46 : vector<2x4x256xf32>
    %c0_19 = arith.constant 0 : index
    %c0_20 = arith.constant 0 : index
    %c0_21 = arith.constant 0 : index
    %48 = vector.load %arg5[%c0_19, %c0_20, %c0_21] : memref<2x4x256xf32, #tpu.memory_space<vmem>>, vector<2x4x256xf32>
    tpu.vector_store %arg5[%c0_19, %c0_20, %c0_21], %47 {strides = array<i32>} : memref<2x4x256xf32, #tpu.memory_space<vmem>>, vector<2x4x256xf32>,
    %c0_22 = arith.constant 0 : index
    %c0_23 = arith.constant 0 : index
    %49 = vector.load %arg6[%c0_22, %c0_23] : memref<4x1xf32, #tpu.memory_space<vmem>>, vector<4x1xf32>
    tpu.vector_store %arg6[%c0_22, %c0_23], %16 {strides = array<i32>} : memref<4x1xf32, #tpu.memory_space<vmem>>, vector<4x1xf32>,
    %c0_24 = arith.constant 0 : index
    %c0_25 = arith.constant 0 : index
    %50 = vector.load %arg7[%c0_24, %c0_25] : memref<4x1xf32, #tpu.memory_space<vmem>>, vector<4x1xf32>
    tpu.vector_store %arg7[%c0_24, %c0_25], %19 {strides = array<i32>} : memref<4x1xf32, #tpu.memory_space<vmem>>, vector<4x1xf32>,
    return
  }
}

</mosaic_0001>

<llo_original>
// kernel: _train_forward.1
$region0: #{_train_forward.1}
  #allocation0 [shape = 'u32[]', space=smem, size = 0x4, offset = 0x4, fixed_abs, tag = 'smem constant byte address 0x4 - core index']
  #allocation1 [shape = 'u32[144,128]{1,0:T(1,128)}', space=vmem, size = 0x12000, scoped, tag = 'internal scratch']
  #allocation2 [shape = 'f32[1,1]{1,0:T(1,128)S(1)}', space=vmem, size = 0x200, scoped, tag = 'scoped memory for _train_forward.1']
  #allocation3 [shape = 'f32[1,1]{1,0:T(1,128)S(1)}', space=vmem, size = 0x200, scoped, tag = 'scoped memory for _train_forward.1']
  %s0 = inlined_call_operand.vmem [shape: f32[2,4,256], index: 0, kind: input, shape index: {}]
  %s1 = inlined_call_operand.vmem [shape: f32[4,1], index: 1, kind: input, shape index: {}]
  %s2 = inlined_call_operand.vmem [shape: f32[4,1], index: 2, kind: input, shape index: {}]
  %s3 = inlined_call_operand.<no memory space> [shape: f32[1,1], index: 3, kind: input, shape index: {}]
  %s4 = inlined_call_operand.<no memory space> [shape: f32[1,1], index: 4, kind: input, shape index: {}]
  %s5 = inlined_call_operand.vmem [shape: f32[2,4,256], index: 5, kind: output, shape index: {0}]
  %s6 = inlined_call_operand.vmem [shape: f32[4,1], index: 6, kind: output, shape index: {1}]
  %s7 = inlined_call_operand.vmem [shape: f32[4,1], index: 7, kind: output, shape index: {2}]
  %8 = xla_tuple %s5, %s6, %s7
  %s9 = sld [smem:[#allocation0]]
  $region46: #{_train_forward.1} parent=0
    _
  %s11 = ssub.s32 1, %s9
  %s12 = scalar_select 0, %s11, %s9
  %v13 = vstv %s3
  %14 = vst [vmem:[#allocation2] sm:$0x1] %v13
  %v15 = vstv %s4
  %16 = vst [vmem:[#allocation3] sm:$0x1] %v15
  // Predicated region
  $region2: #{_train_forward.1} parent=0 // pred_check
    _
  $region3: #{_train_forward.1} parent=0 // pred_check_branch
    %18 = sbr.rel (0) target = $region5
  $region4: #{_train_forward.1} parent=0 // pred_region
    _
  $region5: #{_train_forward.1} parent=0 // pred_fallthru
    _
  // Predicated region
  $region6: #{_train_forward.1} parent=0 // pred_check
    _
  $region7: #{_train_forward.1} parent=0 // pred_check_branch
    %20 = sbr.rel (0) target = $region9
  $region8: #{_train_forward.1} parent=0 // pred_region
    _
  $region9: #{_train_forward.1} parent=0 // pred_fallthru
    _
  // Predicated region
  $region10: #{_train_forward.1} parent=0 // pred_check
    _
  $region11: #{_train_forward.1} parent=0 // pred_check_branch
    %22 = sbr.rel (0) target = $region13
  $region12: #{_train_forward.1} parent=0 // pred_region
    _
  $region13: #{_train_forward.1} parent=0 // pred_fallthru
    _
  // Predicated region
  $region14: #{_train_forward.1} parent=0 // pred_check
    _
  $region15: #{_train_forward.1} parent=0 // pred_check_branch
    %24 = sbr.rel (0) target = $region17
  $region16: #{_train_forward.1} parent=0 // pred_region
    _
  $region17: #{_train_forward.1} parent=0 // pred_fallthru
    _
  // Predicated region
  $region18: #{_train_forward.1} parent=0 // pred_check
    _
  $region19: #{_train_forward.1} parent=0 // pred_check_branch
    %26 = sbr.rel (0) target = $region21
  $region20: #{_train_forward.1} parent=0 // pred_region
    _
  $region21: #{_train_forward.1} parent=0 // pred_fallthru
    _
  %v27 = vld [vmem:[%s0] sm:$0xff]
  %v28 = vld [vmem:[%s0 + $0x8] sm:$0xff]
  %v31 = vcombine.high %v27, %v27
  %v32 = vcombine.high %v28, %v28
  %vm35 = vcmask 1043456
  %v36 = vsel %vm35, %v27, 0.0
  %v37 = vsel %vm35, %v31, 0.0
  %v38 = vadd.f32 %v36, %v37
  %39 = vadd.xlane.f32.xlu0 %v38
  %v40 = vpop.xlane.xlu0 %39
  %v41 = vsel %vm35, %v28, 0.0
  %v42 = vsel %vm35, %v32, 0.0
  %v43 = vadd.f32 %v41, %v42
  %44 = vadd.xlane.f32.xlu0 %v43
  %v45 = vpop.xlane.xlu0 %44
  %v46 = vsel %vm35, %v40, 0.0
  %v47 = vsel %vm35, %v45, 0.0
  %v48 = vadd.f32 %v46, %v47
  %v49 = vmul.f32 %v48, 0.001953125
  %v52 = vunpack.c.l.s4 839922192
  %v53 = vunpack.c.0.s8 %v52
  %v54 = vlaneseq
  %v55 = vshrl.u32 %v54, 7
  %v56 = vsub.s32 %v53, %v55
  %v57 = vrot.slane %v49, %v56
  %v59 = vsub.f32 %v27, %v57
  %v60 = vsub.f32 %v28, %v57
  %v61 = vmul.f32 %v59, %v59
  %v62 = vmul.f32 %v60, %v60
  %v65 = vcombine.high %v61, %v61
  %v66 = vcombine.high %v62, %v62
  %v69 = vsel %vm35, %v61, 0.0
  %v70 = vsel %vm35, %v65, 0.0
  %v71 = vadd.f32 %v69, %v70
  %72 = vadd.xlane.f32.xlu0 %v71
  %v73 = vpop.xlane.xlu0 %72
  %v74 = vsel %vm35, %v62, 0.0
  %v75 = vsel %vm35, %v66, 0.0
  %v76 = vadd.f32 %v74, %v75
  %77 = vadd.xlane.f32.xlu0 %v76
  %v78 = vpop.xlane.xlu0 %77
  %v79 = vsel %vm35, %v73, 0.0
  %v80 = vsel %vm35, %v78, 0.0
  %v81 = vadd.f32 %v79, %v80
  %v82 = vmul.f32 %v81, 0.001953125
  %v83 = vadd.f32 %v49, 1e-05
  %v84 = vadd.f32 %v82, 1e-05
  %v85 = vrsqrt.pop %v84
  %v86 = vmul.f32 %v84, %v85
  %vm87 = vcmp.eq.f32.partialorder %v84, inf
  %v88 = vsel %vm87, %v84, %v86
  %vm89 = vcmp.eq.f32.partialorder %v84, 0.0
  %v90 = vand.u32 %v84, 2147483648
  %v91 = vsel %vm89, %v90, %v88
  %v92 = vld [vmem:[%s1] sm:$0xf]
  %v93 = vld [vmem:[%s2] sm:$0xf]
  %v94 = vld [vmem:[#allocation2] sm:$0x1]
  %v95 = vld [vmem:[#allocation3] sm:$0x1]
  %v96 = vrcp.pop %v93
  %v97 = vmul.f32 %v91, %v96
  %v98 = vrcp.pop %v94
  %v99 = vmul.f32 1.0, %v98
  %v101 = vlaneseq
  %v102 = vshrl.u32 %v101, 7
  %v103 = vsub.s32 0, %v102
  %v104 = vrot.slane %v99, %v103
  %v106 = vmax.f32 %v104, %v97
  %v108 = vlaneseq
  %v109 = vshrl.u32 %v108, 7
  %v110 = vsub.s32 0, %v109
  %v111 = vrot.slane %v94, %v110
  %v113 = vmin.f32 %v111, %v106
  %v114 = vsub.f32 %v83, %v92
  %v115 = vmul.f32 %v114, %v96
  %v116 = vsub.f32 0.0, %v95
  %v118 = vlaneseq
  %v119 = vshrl.u32 %v118, 7
  %v120 = vsub.s32 0, %v119
  %v121 = vrot.slane %v116, %v120
  %v123 = vmax.f32 %v121, %v115
  %v125 = vlaneseq
  %v126 = vshrl.u32 %v125, 7
  %v127 = vsub.s32 0, %v126
  %v128 = vrot.slane %v95, %v127
  %v130 = vmin.f32 %v128, %v123
  %v131 = vrcp.pop %v91
  %v132 = vmul.f32 %v113, %v131
  %v133 = vmul.f32 %v83, %v132
  %v134 = vsub.f32 %v130, %v133
  %136 = vset.pattern.permute.xlu0 0
  %137 = vperm.xlu0 %136, %v132
  %v138 = vpop.permute.xlu0 %137
  %v140 = vunpack.c.l.s4 839922192
  %v141 = vunpack.c.0.s8 %v140
  %v142 = vlaneseq
  %v143 = vshrl.u32 %v142, 7
  %v144 = vsub.s32 %v141, %v143
  %v145 = vrot.slane %v138, %v144
  %v147 = vmul.f32 %v27, %v145
  %v148 = vmul.f32 %v28, %v145
  %150 = vset.pattern.permute.xlu0 0
  %151 = vperm.xlu0 %150, %v134
  %v152 = vpop.permute.xlu0 %151
  %v154 = vunpack.c.l.s4 839922192
  %v155 = vunpack.c.0.s8 %v154
  %v156 = vlaneseq
  %v157 = vshrl.u32 %v156, 7
  %v158 = vsub.s32 %v155, %v157
  %v159 = vrot.slane %v152, %v158
  %v161 = vadd.f32 %v147, %v159
  %v162 = vadd.f32 %v148, %v159
  %163 = vst [vmem:[%s5] sm:$0xff] %v161
  %164 = vst [vmem:[%s5 + $0x8] sm:$0xff] %v162
  %vm165 = vcmask 3072
  %166 = vst.msk [vmem:[%s6] sm:$0xf] %vm165, %v83
  %167 = vst.msk [vmem:[%s7] sm:$0xf] %vm165, %v91
  // Predicated region
  $region22: #{_train_forward.1} parent=0 // pred_check
    _
  $region23: #{_train_forward.1} parent=0 // pred_check_branch
    %169 = sbr.rel (0) target = $region25
  $region24: #{_train_forward.1} parent=0 // pred_region
    _
  $region25: #{_train_forward.1} parent=0 // pred_fallthru
    _
  // Predicated region
  $region26: #{_train_forward.1} parent=0 // pred_check
    _
  $region27: #{_train_forward.1} parent=0 // pred_check_branch
    %171 = sbr.rel (0) target = $region29
  $region28: #{_train_forward.1} parent=0 // pred_region
    _
  $region29: #{_train_forward.1} parent=0 // pred_fallthru
    _
  // Predicated region
  $region30: #{_train_forward.1} parent=0 // pred_check
    _
  $region31: #{_train_forward.1} parent=0 // pred_check_branch
    %173 = sbr.rel (0) target = $region33
  $region32: #{_train_forward.1} parent=0 // pred_region
    _
  $region33: #{_train_forward.1} parent=0 // pred_fallthru
    _
  // Predicated region
  $region34: #{_train_forward.1} parent=0 // pred_check
    _
  $region35: #{_train_forward.1} parent=0 // pred_check_branch
    %175 = sbr.rel (0) target = $region37
  $region36: #{_train_forward.1} parent=0 // pred_region
    _
  $region37: #{_train_forward.1} parent=0 // pred_fallthru
    _
  // Predicated region
  $region38: #{_train_forward.1} parent=0 // pred_check
    _
  $region39: #{_train_forward.1} parent=0 // pred_check_branch
    %177 = sbr.rel (0) target = $region41
  $region40: #{_train_forward.1} parent=0 // pred_region
    _
  $region41: #{_train_forward.1} parent=0 // pred_fallthru
    _
  // Predicated region
  $region42: #{_train_forward.1} parent=0 // pred_check
    _
  $region43: #{_train_forward.1} parent=0 // pred_check_branch
    %179 = sbr.rel (0) target = $region45
  $region44: #{_train_forward.1} parent=0 // pred_region
    _
  $region45: #{_train_forward.1} parent=0 // pred_fallthru
    _

</llo_original>
